<compile_context>
chip_gen: v7x
topology: tpu7x:2x2x1
jax: 0.10.0
libtpu: 0.0.40
codegen_flags: <defaults>
</compile_context>

<pallas_src>
import functools

import jax
import jax.numpy as jnp
from jax.experimental import pallas as pl
from jax.experimental.pallas import tpu as pltpu


def _round_up(n: int, m: int) -> int:
    return ((n + m - 1) // m) * m


def _choose_batch_tile(batch: int, block_b: int) -> int:
    """Pick the batch tile size (multiple of 16 for bf16 sublane packing)."""
    block_b = max(16, (block_b // 16) * 16)
    if batch > block_b:
        return block_b
    if batch >= 64:
        # Whole batch would fit one tile: split into >=2 grid steps so the
        # "parallel" batch axis can shard across v7x's two TensorCores
        # (costs nothing on v5e/v6e, which have a single TC).
        return _round_up(pl.cdiv(batch, 2), 16)
    # Tiny batch: a block equal to the full batch dim is always a legal
    # block shape and avoids any padded edge block.
    return batch


def mlp_kernel(x_ref, w1_ref, b1_ref, w2_ref, b2_ref, o_ref):
    # x streamed from HBM in its original dtype; cast to bf16 on the VPU so
    # the wrapper never makes a separate cast/pad pass over x in HBM.
    x = x_ref[...].astype(jnp.bfloat16)

    # shared_layer: Linear(D_in, 256) + ReLU.
    # bf16 MXU operands, f32 accumulation; bias-add / ReLU stay f32.
    h = jnp.dot(x, w1_ref[...], preferred_element_type=jnp.float32) + b1_ref[...]
    h = jnp.maximum(h, 0.0)

    # final_layer: Linear(256, D_out). Activations cast to bf16 for the MXU.
    out = jnp.dot(h.astype(w2_ref.dtype), w2_ref[...],
                  preferred_element_type=jnp.float32) + b2_ref[...]
    o_ref[...] = out.astype(o_ref.dtype)


@functools.partial(jax.jit, static_argnames=("block_b",))
def neural_net_forward(x, w1, b1, w2, b2, *, block_b: int = 2048):
    """Fused NeuralNet forward: relu(x @ w1 + b1) @ w2 + b2.

    x:  [B, D_in]   (any float dtype)
    w1: [D_in, 256]  (pre-transposed vs. torch Linear.weight), b1: [256]/[1,256]
    w2: [256, D_out] (pre-transposed), b2: [D_out]/[1, D_out]
    """
    B, D_in = x.shape
    H = w1.shape[1]
    D_out = w2.shape[1]
    out_dtype = x.dtype

    b1 = b1.reshape(1, H).astype(jnp.float32)
    b2 = b2.reshape(1, D_out).astype(jnp.float32)

    # bf16 resident weights for the MXU (one-time, small); x stays untouched.
    w1_in = w1.astype(jnp.bfloat16)
    w2_in = w2.astype(jnp.bfloat16)

    # Batch tiling: no padding of B, masked partial edge block via cdiv grid.
    TB = _choose_batch_tile(B, block_b)
    grid = (pl.cdiv(B, TB),)

    # VMEM budget (double-buffered streamed tiles + resident weights + h).
    x_item = x.dtype.itemsize
    o_item = jnp.dtype(out_dtype).itemsize
    vmem_need = (2 * TB * D_in * x_item            # x tile (double-buffered)
                 + 2 * TB * D_out * o_item         # out tile (double-buffered)
                 + 2 * (D_in * H + H * D_out) * 2  # bf16 weights (worst case 2x)
                 + 2 * (H + D_out) * 4             # biases
                 + TB * H * 4)                     # f32 intermediate h
    vmem_limit = int(min(max(vmem_need + (8 << 20), 16 << 20), 64 << 20))

    cost = pl.CostEstimate(
        flops=2 * B * (D_in * H + H * D_out),
        transcendentals=0,
        bytes_accessed=(x.size * x_item
                        + w1_in.size * 2 + w2_in.size * 2
                        + b1.size * 4 + b2.size * 4
                        + B * D_out * o_item),
    )

    out = pl.pallas_call(
        mlp_kernel,
        out_shape=jax.ShapeDtypeStruct((B, D_out), out_dtype),
        grid=grid,
        in_specs=[
            pl.BlockSpec((TB, D_in), lambda i: (i, 0)),    # x: streamed
            pl.BlockSpec((D_in, H), lambda i: (0, 0)),     # w1: resident
            pl.BlockSpec((1, H), lambda i: (0, 0)),        # b1: resident
            pl.BlockSpec((H, D_out), lambda i: (0, 0)),    # w2: resident
            pl.BlockSpec((1, D_out), lambda i: (0, 0)),    # b2: resident
        ],
        out_specs=pl.BlockSpec((TB, D_out), lambda i: (i, 0)),
        compiler_params=pltpu.CompilerParams(
            dimension_semantics=("parallel",),             # v7x: 2-TC shard
            vmem_limit_bytes=vmem_limit,
        ),
        cost_estimate=cost,
    )(x, w1_in, b1, w2_in, b2)

    return out


def init_params(key, d_in, d_hidden, d_out, dtype=jnp.float32):
    """Deterministic init mimicking torch.nn.Linear (uniform +/- 1/sqrt(fan_in))."""
    k1, k2, k3, k4 = jax.random.split(key, 4)
    bound1 = 1.0 / jnp.sqrt(d_in)
    bound2 = 1.0 / jnp.sqrt(d_hidden)
    w1 = jax.random.uniform(k1, (d_in, d_hidden), dtype, -bound1, bound1)
    b1 = jax.random.uniform(k2, (1, d_hidden), dtype, -bound1, bound1)
    w2 = jax.random.uniform(k3, (d_hidden, d_out), dtype, -bound2, bound2)
    b2 = jax.random.uniform(k4, (1, d_out), dtype, -bound2, bound2)
    return w1, b1, w2, b2


if __name__ == "__main__":
    key = jax.random.PRNGKey(0)
    kx, kx2, kp = jax.random.split(key, 3)

    D_IN, D_HIDDEN, D_OUT = 32, 256, 16
    w1, b1, w2, b2 = init_params(kp, D_IN, D_HIDDEN, D_OUT)

    def ref_fwd(xv):
        return jnp.maximum(xv @ w1 + b1, 0.0) @ w2 + b2

    # Case 1: tiny batch (single grid step, block == full batch dim).
    B1 = 8
    x1 = jax.random.normal(kx, (B1, D_IN), jnp.float32)
    out1 = neural_net_forward(x1, w1, b1, w2, b2)
    jax.block_until_ready(out1)
    assert out1.shape == (B1, D_OUT)
    assert jnp.allclose(out1, ref_fwd(x1), atol=5e-2, rtol=5e-2), (
        float(jnp.max(jnp.abs(out1 - ref_fwd(x1)))))

    # Case 2: batch split into 2 grid steps with a masked partial edge block.
    B2 = 72
    x2 = jax.random.normal(kx2, (B2, D_IN), jnp.float32)
    out2 = neural_net_forward(x2, w1, b1, w2, b2)
    jax.block_until_ready(out2)
    assert out2.shape == (B2, D_OUT)
    assert jnp.allclose(out2, ref_fwd(x2), atol=5e-2, rtol=5e-2), (
        float(jnp.max(jnp.abs(out2 - ref_fwd(x2)))))

    print("KERNEL_OK")
</pallas_src>

<mosaic_0001>
module attributes {stable_mosaic.version = 11 : i64} {
  func.func @mlp_kernel(%arg0: i32, %arg1: memref<8x32xf32, #tpu.memory_space<vmem>>, %arg2: memref<32x256xbf16, #tpu.memory_space<vmem>>, %arg3: memref<1x256xf32, #tpu.memory_space<vmem>>, %arg4: memref<256x16xbf16, #tpu.memory_space<vmem>>, %arg5: memref<1x16xf32, #tpu.memory_space<vmem>>, %arg6: memref<8x16xf32, #tpu.memory_space<vmem>>) attributes {dimension_semantics = [#tpu.dimension_semantics<parallel>], iteration_bounds = array<i64: 1>, scalar_prefetch = 0 : i64, scratch_operands = 0 : i64, tpu.core_type = #tpu.core_type<tc>, window_params = [{transform_indices = @transform_0, window_bounds = array<i64: 8, 32>}, {pipeline_mode = #tpu.pipeline_mode<synchronous>, transform_indices = @transform_1, window_bounds = array<i64: 32, 256>}, {pipeline_mode = #tpu.pipeline_mode<synchronous>, transform_indices = @transform_2, window_bounds = array<i64: 1, 256>}, {pipeline_mode = #tpu.pipeline_mode<synchronous>, transform_indices = @transform_3, window_bounds = array<i64: 256, 16>}, {pipeline_mode = #tpu.pipeline_mode<synchronous>, transform_indices = @transform_4, window_bounds = array<i64: 1, 16>}, {transform_indices = @transform_5, window_bounds = array<i64: 8, 16>}]} {
    %c0 = arith.constant 0 : index
    %c0_0 = arith.constant 0 : index
    %0 = vector.load %arg1[%c0, %c0_0] : memref<8x32xf32, #tpu.memory_space<vmem>>, vector<8x32xf32>
    %1 = arith.truncf %0 : vector<8x32xf32> to vector<8x32xbf16>
    %c0_1 = arith.constant 0 : index
    %c0_2 = arith.constant 0 : index
    %2 = vector.load %arg2[%c0_1, %c0_2] : memref<32x256xbf16, #tpu.memory_space<vmem>>, vector<32x256xbf16>
    %cst = arith.constant dense<0.000000e+00> : vector<8x256xf32>
    %3 = tpu.matmul %1, %2, %cst {dimension_numbers = #tpu.dot_dimension_numbers<[1], [0], [0], [1], [0, 0, 1, 1], [], []>} : vector<8x32xbf16>, vector<32x256xbf16>, vector<8x256xf32> -> vector<8x256xf32>
    %c0_3 = arith.constant 0 : index
    %c0_4 = arith.constant 0 : index
    %4 = vector.load %arg3[%c0_3, %c0_4] : memref<1x256xf32, #tpu.memory_space<vmem>>, vector<1x256xf32>
    %5 = vector.broadcast %4 : vector<1x256xf32> to vector<8x256xf32>
    %6 = arith.addf %3, %5 : vector<8x256xf32>
    %cst_5 = arith.constant 0.000000e+00 : f32
    %7 = vector.broadcast %cst_5 : f32 to vector<8x256xf32>
    %8 = arith.maximumf %6, %7 : vector<8x256xf32>
    %9 = arith.truncf %8 : vector<8x256xf32> to vector<8x256xbf16>
    %c0_6 = arith.constant 0 : index
    %c0_7 = arith.constant 0 : index
    %10 = vector.load %arg4[%c0_6, %c0_7] : memref<256x16xbf16, #tpu.memory_space<vmem>>, vector<256x16xbf16>
    %cst_8 = arith.constant dense<0.000000e+00> : vector<8x16xf32>
    %11 = tpu.matmul %9, %10, %cst_8 {dimension_numbers = #tpu.dot_dimension_numbers<[1], [0], [0], [1], [0, 0, 1, 1], [], []>} : vector<8x256xbf16>, vector<256x16xbf16>, vector<8x16xf32> -> vector<8x16xf32>
    %c0_9 = arith.constant 0 : index
    %c0_10 = arith.constant 0 : index
    %12 = vector.load %arg5[%c0_9, %c0_10] : memref<1x16xf32, #tpu.memory_space<vmem>>, vector<1x16xf32>
    %13 = vector.broadcast %12 : vector<1x16xf32> to vector<8x16xf32>
    %14 = arith.addf %11, %13 : vector<8x16xf32>
    %c0_11 = arith.constant 0 : index
    %c0_12 = arith.constant 0 : index
    %15 = vector.load %arg6[%c0_11, %c0_12] : memref<8x16xf32, #tpu.memory_space<vmem>>, vector<8x16xf32>
    tpu.vector_store %arg6[%c0_11, %c0_12], %14 {strides = array<i32>} : memref<8x16xf32, #tpu.memory_space<vmem>>, vector<8x16xf32>,
    return
  }
  func.func @transform_0(%arg0: i32) -> (i32, i32) {
    %c0_i32 = arith.constant 0 : i32
    %c0_i32_0 = arith.constant 0 : i32
    return %arg0, %c0_i32 : i32, i32
  }
  func.func @transform_1(%arg0: i32) -> (i32, i32) {
    %c0_i32 = arith.constant 0 : i32
    %c0_i32_0 = arith.constant 0 : i32
    %c0_i32_1 = arith.constant 0 : i32
    return %c0_i32, %c0_i32_0 : i32, i32
  }
  func.func @transform_2(%arg0: i32) -> (i32, i32) {
    %c0_i32 = arith.constant 0 : i32
    %c0_i32_0 = arith.constant 0 : i32
    %c0_i32_1 = arith.constant 0 : i32
    return %c0_i32, %c0_i32_0 : i32, i32
  }
  func.func @transform_3(%arg0: i32) -> (i32, i32) {
    %c0_i32 = arith.constant 0 : i32
    %c0_i32_0 = arith.constant 0 : i32
    %c0_i32_1 = arith.constant 0 : i32
    return %c0_i32, %c0_i32_0 : i32, i32
  }
  func.func @transform_4(%arg0: i32) -> (i32, i32) {
    %c0_i32 = arith.constant 0 : i32
    %c0_i32_0 = arith.constant 0 : i32
    %c0_i32_1 = arith.constant 0 : i32
    return %c0_i32, %c0_i32_0 : i32, i32
  }
  func.func @transform_5(%arg0: i32) -> (i32, i32) {
    %c0_i32 = arith.constant 0 : i32
    %c0_i32_0 = arith.constant 0 : i32
    return %arg0, %c0_i32 : i32, i32
  }
}

</mosaic_0001>

<llo_original>
// kernel: neural_net_forward.1
$region0: #{neural_net_forward.1}
  #allocation0 [shape = 'u32[]', space=smem, size = 0x4, offset = 0x4, fixed_abs, tag = 'smem constant byte address 0x4 - core index']
  #allocation1 [shape = 'u32[144,128]{1,0:T(1,128)}', space=vmem, size = 0x12000, scoped, tag = 'internal scratch']
  %s0 = inlined_call_operand.vmem [shape: f32[8,32], index: 0, kind: input, shape index: {}]
  %s1 = inlined_call_operand.vmem [shape: bf16[32,256], index: 1, kind: input, shape index: {}]
  %s2 = inlined_call_operand.vmem [shape: f32[1,256], index: 2, kind: input, shape index: {}]
  %s3 = inlined_call_operand.vmem [shape: bf16[256,16], index: 3, kind: input, shape index: {}]
  %s4 = inlined_call_operand.vmem [shape: f32[1,16], index: 4, kind: input, shape index: {}]
  %s5 = inlined_call_operand.hbm [shape: f32[8,16], index: 5, kind: output, shape index: {}]
  %s6 = sld [smem:[#allocation0]]
  $region30: #{neural_net_forward.1} parent=0
    _
  %s8 = ssub.s32 1, %s6
  %s9 = scalar_select 0, %s8, %s6
  $region1: #{neural_net_forward.1} parent=0
    #allocation2 [shape = 'u8[4096]{0}', space=vmem, size = 0x1000, scoped, tag = 'output window, operand 0, single buffered']
    #allocation3 [shape = 's32[1]{0}', space=sflag, size = 0x4, scoped, tag = 'scoped memory for neural_net_forward.1']
    %10 = vsyncpa [#allocation3], 0
    // Predicated region
    $region2: #{neural_net_forward.1} parent=1 // pred_check
      _
    $region3: #{neural_net_forward.1} parent=1 // pred_check_branch
      %12 = sbr.rel (0) target = $region5
    $region4: #{neural_net_forward.1} parent=1 // pred_region
      _
    $region5: #{neural_net_forward.1} parent=1 // pred_fallthru
      _
    // Predicated region
    $region6: #{neural_net_forward.1} parent=1 // pred_check
      _
    $region7: #{neural_net_forward.1} parent=1 // pred_check_branch
      %14 = sbr.rel (0) target = $region9
    $region8: #{neural_net_forward.1} parent=1 // pred_region
      _
    $region9: #{neural_net_forward.1} parent=1 // pred_fallthru
      _
    // Predicated region
    $region10: #{neural_net_forward.1} parent=1 // pred_check
      _
    $region11: #{neural_net_forward.1} parent=1 // pred_check_branch
      %16 = sbr.rel (0) target = $region13
    $region12: #{neural_net_forward.1} parent=1 // pred_region
      _
    $region13: #{neural_net_forward.1} parent=1 // pred_fallthru
      _
    // Predicated region
    $region14: #{neural_net_forward.1} parent=1 // pred_check
      _
    $region15: #{neural_net_forward.1} parent=1 // pred_check_branch
      %18 = sbr.rel (0) target = $region17
    $region16: #{neural_net_forward.1} parent=1 // pred_region
      _
    $region17: #{neural_net_forward.1} parent=1 // pred_fallthru
      _
    // Predicated region
    $region18: #{neural_net_forward.1} parent=1 // pred_check
      _
    $region19: #{neural_net_forward.1} parent=1 // pred_check_branch
      %20 = sbr.rel (0) target = $region21
    $region20: #{neural_net_forward.1} parent=1 // pred_region
      _
    $region21: #{neural_net_forward.1} parent=1 // pred_fallthru
      _
    %v22 = vld [vmem:[%s0] sm:$0xff]
    %v23 = vpack.c.bf16 %v22, %v22
    %v24 = vld [vmem:[%s1] sm:$0xff]
    %v25 = vld [vmem:[%s1 + $0x8] sm:$0xff]
    %v26 = vld [vmem:[%s1 + $0x10] sm:$0xff]
    %v27 = vld [vmem:[%s1 + $0x18] sm:$0xff]
    %v28 = vld [vmem:[%s2] sm:$0x3]
    %v30 = vlaneseq
    %v31 = vshrl.u32 %v30, 7
    %v32 = vsub.s32 0, %v31
    %v33 = vrot.slane %v28, %v32
    %v34 = vlaneseq
    %v35 = vshrl.u32 %v34, 7
    %v36 = vsub.s32 1, %v35
    %v37 = vrot.slane %v28, %v36
    %v44 = vunpack.c.l.b16 %v24
    %v45 = vunpack.c.h.b16 %v24
    %v46 = vunpack.c.l.b16 %v25
    %v47 = vunpack.c.h.b16 %v25
    %v48 = vunpack.c.l.b16 %v26
    %v49 = vunpack.c.h.b16 %v26
    %v50 = vunpack.c.l.b16 %v27
    %v51 = vunpack.c.h.b16 %v27
    %v52 = vpack.c.b16 %v46, %v44
    %v53 = vpack.c.b16 %v47, %v45
    %v54 = vpack.c.b16 %v50, %v48
    %v55 = vpack.c.b16 %v51, %v49
    %vm60 = vcmask 261120
    %v62 = vsel %vm60, %v23, 0
    %64 = vmatprep.subr.bf16.mxu0 %v53
    %65 = vmatpush1.bf16.msra.mxu0 %v52
    %66 = vmatprep.subr.bf16.mxu0 %v55
    %67 = vmatpush1.bf16.msra.mxu0 %v54
    %68 = vmatprep.subr.bf16.mxu0 0
    %69 = vmatpush1.bf16.msra.mxu0 0
    %70 = vmatprep.subr.bf16.mxu0 0
    %71 = vmatpush1.bf16.msra.mxu0 0
    %72 = vmatprep.subr.bf16.mxu0 0
    %73 = vmatpush1.bf16.msra.mxu0 0
    %74 = vmatprep.subr.bf16.mxu0 0
    %75 = vmatpush1.bf16.msra.mxu0 0
    %76 = vmatprep.subr.bf16.mxu0 0
    %77 = vmatpush1.bf16.msra.mxu0 0
    %78 = vmatprep.subr.bf16.mxu0 0
    %79 = vmatpush1.bf16.msra.mxu0 0
    %80 = vmatprep.subr.bf16.mxu0 0
    %81 = vmatpush1.bf16.msra.mxu0 0
    %82 = vmatprep.subr.bf16.mxu0 0
    %83 = vmatpush1.bf16.msra.mxu0 0
    %84 = vmatprep.subr.bf16.mxu0 0
    %85 = vmatpush1.bf16.msra.mxu0 0
    %86 = vmatprep.subr.bf16.mxu0 0
    %87 = vmatpush1.bf16.msra.mxu0 0
    %88 = vmatprep.subr.bf16.mxu0 0
    %89 = vmatpush1.bf16.msra.mxu0 0
    %90 = vmatprep.subr.bf16.mxu0 0
    %91 = vmatpush1.bf16.msra.mxu0 0
    %92 = vmatprep.subr.bf16.mxu0 0
    %93 = vmatpush1.bf16.msra.mxu0 0
    %94 = vmatprep.subr.bf16.mxu0 0
    %95 = vmatpush1.bf16.msra.mxu0 0
    %96 = vmatprep.mubr.bf16.mxu0 0
    %97 = vmatmul.mubr.bf16.gmra.mrb[0].mxu0 %v62
    %v98 = vpop.f32.mrb[0].mxu0
    %v99 = vadd.f32 %v33, %v98
    %v100 = vpop.f32.mrb[0].mxu0
    %v101 = vadd.f32 %v37, %v100
    %v102 = vpop.f32.mrb[0].mxu0
    %v103 = vpop.f32.mrb[0].mxu0
    %104 = vdwg.mxu0
    %v105 = vmax.f32 %v99, 0.0
    %v106 = vmax.f32 %v101, 0.0
    %v107 = vpack.c.bf16 %v105, %v105
    %v108 = vpack.c.bf16 %v106, %v106
    %v109 = vld [vmem:[%s3] sm:$0xf]
    %v110 = vld [vmem:[%s3 + $0x4] sm:$0xf]
    %v111 = vld [vmem:[%s3 + $0x8] sm:$0xf]
    %v112 = vld [vmem:[%s3 + $0xc] sm:$0xf]
    %v113 = vld [vmem:[%s3 + $0x10] sm:$0xf]
    %v114 = vld [vmem:[%s3 + $0x14] sm:$0xf]
    %v115 = vld [vmem:[%s3 + $0x18] sm:$0xf]
    %v116 = vld [vmem:[%s3 + $0x1c] sm:$0xf]
    %v117 = vld [vmem:[%s3 + $0x20] sm:$0xf]
    %v118 = vld [vmem:[%s3 + $0x24] sm:$0xf]
    %v119 = vld [vmem:[%s3 + $0x28] sm:$0xf]
    %v120 = vld [vmem:[%s3 + $0x2c] sm:$0xf]
    %v121 = vld [vmem:[%s3 + $0x30] sm:$0xf]
    %v122 = vld [vmem:[%s3 + $0x34] sm:$0xf]
    %v123 = vld [vmem:[%s3 + $0x38] sm:$0xf]
    %v124 = vld [vmem:[%s3 + $0x3c] sm:$0xf]
    %v125 = vld [vmem:[%s3 + $0x40] sm:$0xf]
    %v126 = vld [vmem:[%s3 + $0x44] sm:$0xf]
    %v127 = vld [vmem:[%s3 + $0x48] sm:$0xf]
    %v128 = vld [vmem:[%s3 + $0x4c] sm:$0xf]
    %v129 = vld [vmem:[%s3 + $0x50] sm:$0xf]
    %v130 = vld [vmem:[%s3 + $0x54] sm:$0xf]
    %v131 = vld [vmem:[%s3 + $0x58] sm:$0xf]
    %v132 = vld [vmem:[%s3 + $0x5c] sm:$0xf]
    %v133 = vld [vmem:[%s3 + $0x60] sm:$0xf]
    %v134 = vld [vmem:[%s3 + $0x64] sm:$0xf]
    %v135 = vld [vmem:[%s3 + $0x68] sm:$0xf]
    %v136 = vld [vmem:[%s3 + $0x6c] sm:$0xf]
    %v137 = vld [vmem:[%s3 + $0x70] sm:$0xf]
    %v138 = vld [vmem:[%s3 + $0x74] sm:$0xf]
    %v139 = vld [vmem:[%s3 + $0x78] sm:$0xf]
    %v140 = vld [vmem:[%s3 + $0x7c] sm:$0xf]
    %v141 = vld [vmem:[%s4] sm:$0x1]
    %v143 = vlaneseq
    %v144 = vshrl.u32 %v143, 7
    %v145 = vsub.s32 0, %v144
    %v146 = vrot.slane %v141, %v145
    %v180 = vunpack.c.l.b16 %v109
    %v181 = vunpack.c.l.b16 %v110
    %v182 = vunpack.c.l.b16 %v111
    %v183 = vunpack.c.l.b16 %v112
    %v184 = vunpack.c.l.b16 %v113
    %v185 = vunpack.c.l.b16 %v114
    %v186 = vunpack.c.l.b16 %v115
    %v187 = vunpack.c.l.b16 %v116
    %v188 = vunpack.c.l.b16 %v117
    %v189 = vunpack.c.l.b16 %v118
    %v190 = vunpack.c.l.b16 %v119
    %v191 = vunpack.c.l.b16 %v120
    %v192 = vunpack.c.l.b16 %v121
    %v193 = vunpack.c.l.b16 %v122
    %v194 = vunpack.c.l.b16 %v123
    %v195 = vunpack.c.l.b16 %v124
    %v196 = vunpack.c.l.b16 %v125
    %v197 = vunpack.c.l.b16 %v126
    %v198 = vunpack.c.l.b16 %v127
    %v199 = vunpack.c.l.b16 %v128
    %v200 = vunpack.c.l.b16 %v129
    %v201 = vunpack.c.l.b16 %v130
    %v202 = vunpack.c.l.b16 %v131
    %v203 = vunpack.c.l.b16 %v132
    %v204 = vunpack.c.l.b16 %v133
    %v205 = vunpack.c.l.b16 %v134
    %v206 = vunpack.c.l.b16 %v135
    %v207 = vunpack.c.l.b16 %v136
    %v208 = vunpack.c.l.b16 %v137
    %v209 = vunpack.c.l.b16 %v138
    %v210 = vunpack.c.l.b16 %v139
    %v211 = vunpack.c.l.b16 %v140
    %v212 = vpack.c.b16 %v181, %v180
    %v213 = vpack.c.b16 %v183, %v182
    %v214 = vpack.c.b16 %v185, %v184
    %v215 = vpack.c.b16 %v187, %v186
    %v216 = vpack.c.b16 %v189, %v188
    %v217 = vpack.c.b16 %v191, %v190
    %v218 = vpack.c.b16 %v193, %v192
    %v219 = vpack.c.b16 %v195, %v194
    %v220 = vpack.c.b16 %v197, %v196
    %v221 = vpack.c.b16 %v199, %v198
    %v222 = vpack.c.b16 %v201, %v200
    %v223 = vpack.c.b16 %v203, %v202
    %v224 = vpack.c.b16 %v205, %v204
    %v225 = vpack.c.b16 %v207, %v206
    %v226 = vpack.c.b16 %v209, %v208
    %v227 = vpack.c.b16 %v211, %v210
    %244 = vmatprep.subr.bf16.mxu0 0
    %245 = vmatpush1.bf16.msra.mxu0 %v212
    %246 = vmatprep.subr.bf16.mxu0 0
    %247 = vmatpush1.bf16.msra.mxu0 %v213
    %248 = vmatprep.subr.bf16.mxu0 0
    %249 = vmatpush1.bf16.msra.mxu0 %v214
    %250 = vmatprep.subr.bf16.mxu0 0
    %251 = vmatpush1.bf16.msra.mxu0 %v215
    %252 = vmatprep.subr.bf16.mxu0 0
    %253 = vmatpush1.bf16.msra.mxu0 %v216
    %254 = vmatprep.subr.bf16.mxu0 0
    %255 = vmatpush1.bf16.msra.mxu0 %v217
    %256 = vmatprep.subr.bf16.mxu0 0
    %257 = vmatpush1.bf16.msra.mxu0 %v218
    %258 = vmatprep.subr.bf16.mxu0 0
    %259 = vmatpush1.bf16.msra.mxu0 %v219
    %260 = vmatprep.subr.bf16.mxu0 0
    %261 = vmatpush1.bf16.msra.mxu0 %v220
    %262 = vmatprep.subr.bf16.mxu0 0
    %263 = vmatpush1.bf16.msra.mxu0 %v221
    %264 = vmatprep.subr.bf16.mxu0 0
    %265 = vmatpush1.bf16.msra.mxu0 %v222
    %266 = vmatprep.subr.bf16.mxu0 0
    %267 = vmatpush1.bf16.msra.mxu0 %v223
    %268 = vmatprep.subr.bf16.mxu0 0
    %269 = vmatpush1.bf16.msra.mxu0 %v224
    %270 = vmatprep.subr.bf16.mxu0 0
    %271 = vmatpush1.bf16.msra.mxu0 %v225
    %272 = vmatprep.subr.bf16.mxu0 0
    %273 = vmatpush1.bf16.msra.mxu0 %v226
    %274 = vmatprep.subr.bf16.mxu0 0
    %275 = vmatpush1.bf16.msra.mxu0 %v227
    %276 = vmatprep.mubr.bf16.mxu0 %v108
    %277 = vmatmul.mubr.bf16.gmra.mrb[0].mxu0 %v107
    %v278 = vpop.f32.mrb[0].mxu0
    %v279 = vadd.f32 %v146, %v278
    %v280 = vpop.f32.mrb[0].mxu0
    %v281 = vpop.f32.mrb[0].mxu0
    %v282 = vpop.f32.mrb[0].mxu0
    %283 = vdwg.mxu0
    %vm284 = vcmask 130048
    %285 = vst.msk [vmem:[#allocation2] sm:$0xff] %vm284, %v279
    // Predicated region
    $region22: #{neural_net_forward.1} parent=1 // pred_check
      _
    $region23: #{neural_net_forward.1} parent=1 // pred_check_branch
      %287 = sbr.rel (0) target = $region25
    $region24: #{neural_net_forward.1} parent=1 // pred_region
      %s289 = ssub.s32 128, 128
      %290 = vsyncadd [#allocation3], %s289
      %s292 = sshll.u32 [#allocation2], 4
      %s293 = int_to_ptr.vmem [resolvable:$true] %s292
      %295 = dma.vmem_to_hbm [thread:$0]  %s293, 128, %s5, [#allocation3]
    $region25: #{neural_net_forward.1} parent=1 // pred_fallthru
      _
    // Predicated region
    $region26: #{neural_net_forward.1} parent=1 // pred_check
      _
    $region27: #{neural_net_forward.1} parent=1 // pred_check_branch
      %297 = sbr.rel (0) target = $region29
    $region28: #{neural_net_forward.1} parent=1 // pred_region
      %298 = dma.done [#allocation3], 128
    $region29: #{neural_net_forward.1} parent=1 // pred_fallthru
      _
    %299 = vsyncpa [#allocation3], 1

</llo_original>
